<compile_context>
chip_gen: v6e
topology: v6e:2x2x1
jax: 0.10.0
libtpu: 0.0.40
codegen_flags: <defaults>
</compile_context>

<pallas_src>
import functools

import jax
import jax.numpy as jnp
from jax.experimental import pallas as pl
from jax.experimental.pallas import tpu as pltpu


def _gaussian_noise_nn_kernel(x_ref, w1_ref, b1_ref, w2_ref, b2_ref,
                              w3_ref, b3_ref, tri_ref, o_ref):
    # ---- fc1 + relu (MXU; K is tiny but the MXU has huge slack here). ----
    h1 = jnp.dot(x_ref[...], w1_ref[...], preferred_element_type=jnp.float32)
    h1 = jnp.maximum(h1 + b1_ref[...], 0.0)                  # (TB, 64)

    # ---- fc2 + relu (MXU). ----
    h2 = jnp.dot(h1, w2_ref[...], preferred_element_type=jnp.float32)
    h2 = jnp.maximum(h2 + b2_ref[...], 0.0)                  # (TB, 128)

    # ---- fc3 (MXU).  Padded output columns carry bias -1e30. ----
    logits = jnp.dot(h2, w3_ref[...], preferred_element_type=jnp.float32)
    logits = logits + b3_ref[...]                             # (TB, Npad)

    # ---- softmax over the feature axis (dim=1). ----
    m = jnp.max(logits, axis=-1, keepdims=True)
    e = jnp.exp(logits - m)               # padded columns underflow to exactly 0
    denom = jnp.sum(e, axis=-1, keepdims=True)
    p = e / denom                         # exact; denom is only (TB, 1)

    # ---- cumsum over dim=1 on the MXU:
    #      per 128-lane block: inclusive scan = block @ tri (tri[i,j]=1 iff i<=j),
    #      then add the running carry (cumulative total of previous blocks). ----
    tri = tri_ref[...]                                        # (128, 128)
    n_blocks = p.shape[-1] // 128
    carry = jnp.zeros((p.shape[0], 1), jnp.float32)
    for b in range(n_blocks):             # unrolled: n_blocks is a small static int
        blk = p[:, b * 128:(b + 1) * 128]
        scan = jnp.dot(blk, tri, preferred_element_type=jnp.float32)
        out_blk = scan + carry
        o_ref[:, b * 128:(b + 1) * 128] = out_blk.astype(o_ref.dtype)
        if b + 1 < n_blocks:
            carry = out_blk[:, 127:128]   # cumulative total through block b


def prepare_params(w1, b1, w2, b2, w3, b3):
    """One-time weight prep (outside the per-call path).

    Pads the fc3 output dim up to a multiple of 128 lanes; padded columns get
    bias -1e30 (=> zero softmax probability) so the cumsum over the real
    columns is unchanged.  Also builds the 128x128 triangular constant used by
    the MXU cumsum.  Returns (params, n_out).
    """
    n = w3.shape[1]
    n_pad = ((n + 127) // 128) * 128
    if n_pad != n:
        w3 = jnp.concatenate(
            [w3, jnp.zeros((w3.shape[0], n_pad - n), w3.dtype)], axis=1)
        b3 = jnp.concatenate(
            [b3, jnp.full((1, n_pad - n), -1e30, b3.dtype)], axis=1)
    idx = jnp.arange(128)
    tri = (idx[:, None] <= idx[None, :]).astype(jnp.float32)   # inclusive scan
    return (w1, b1, w2, b2, w3, b3, tri), n


@functools.partial(jax.jit, static_argnames=("n_out", "padded_output"))
def gaussian_noise_nn_forward(x, params, n_out, padded_output=False):
    """x: (B, F) float32.  params: output of prepare_params.

    Returns (B, n_out) by default, or the lane-dense padded (B_pad, Npad)
    kernel output when padded_output=True (skips one full HBM copy).
    """
    # TODO(synk): the optional `c` conditioning path would be a wrapper-side
    # jnp.concatenate([x, c[:, None]], axis=1) before calling this function.
    w1, b1, w2, b2, w3, b3, tri = params
    b_in, f_in = x.shape
    n_pad = w3.shape[1]

    # Batch tiling: small batches get a single resident tile; mid batches use
    # 128-row tiles (>=2 grid steps -> both v7x TensorCores busy); large
    # batches use 512-row tiles to amortize per-step pipeline overhead.
    if b_in <= 128:
        tb = max(8, ((b_in + 7) // 8) * 8)
    elif b_in <= 1024:
        tb = 128
    else:
        tb = 512
    b_pad = ((b_in + tb - 1) // tb) * tb
    if b_pad != b_in:
        x = jnp.zeros((b_pad, f_in), x.dtype).at[:b_in, :].set(x)

    const = lambda i: (0, 0)
    out = pl.pallas_call(
        _gaussian_noise_nn_kernel,
        out_shape=jax.ShapeDtypeStruct((b_pad, n_pad), jnp.float32),
        grid_spec=pltpu.PrefetchScalarGridSpec(
            num_scalar_prefetch=0,
            grid=(b_pad // tb,),
            in_specs=[
                pl.BlockSpec((tb, f_in), lambda i: (i, 0)),   # x, blocked on B
                pl.BlockSpec(w1.shape, const),                # weights resident
                pl.BlockSpec(b1.shape, const),
                pl.BlockSpec(w2.shape, const),
                pl.BlockSpec(b2.shape, const),
                pl.BlockSpec(w3.shape, const),
                pl.BlockSpec(b3.shape, const),
                pl.BlockSpec(tri.shape, const),               # 128x128 scan matrix
            ],
            out_specs=pl.BlockSpec((tb, n_pad), lambda i: (i, 0)),
        ),
        compiler_params=pltpu.CompilerParams(
            dimension_semantics=("parallel",),
        ),
    )(x, w1, b1, w2, b2, w3, b3, tri)
    if padded_output:
        return out
    return out[:b_in, :n_out]


def init_params(key, input_size=2, output_ntimejumps=500):
    k1, k2, k3, k4, k5, k6 = jax.random.split(key, 6)
    w1 = jax.random.normal(k1, (input_size, 64), jnp.float32) * 0.5
    b1 = jax.random.normal(k2, (1, 64), jnp.float32) * 0.1
    w2 = jax.random.normal(k3, (64, 128), jnp.float32) * 0.1
    b2 = jax.random.normal(k4, (1, 128), jnp.float32) * 0.1
    w3 = jax.random.normal(k5, (128, output_ntimejumps), jnp.float32) * 0.1
    b3 = jax.random.normal(k6, (1, output_ntimejumps), jnp.float32) * 0.1
    return w1, b1, w2, b2, w3, b3


def reference_forward(x, w1, b1, w2, b2, w3, b3):
    h1 = jax.nn.relu(x @ w1 + b1)
    h2 = jax.nn.relu(h1 @ w2 + b2)
    p = jax.nn.softmax(h2 @ w3 + b3, axis=1)
    return jnp.cumsum(p, axis=1)


if __name__ == "__main__":
    key = jax.random.PRNGKey(0)
    kx, kp = jax.random.split(key)

    B, input_size, output_ntimejumps = 8, 2, 500
    x = jax.random.normal(kx, (B, input_size), jnp.float32)
    raw_params = init_params(kp, input_size=input_size,
                             output_ntimejumps=output_ntimejumps)

    params, n_out = prepare_params(*raw_params)      # one-time weight prep
    y = gaussian_noise_nn_forward(x, params, n_out)
    y = jax.block_until_ready(y)

    y_ref = reference_forward(x, *raw_params)
    assert y.shape == (B, output_ntimejumps)
    assert jnp.allclose(y, y_ref, atol=1e-4, rtol=1e-4), "mismatch vs JAX reference"

    print("KERNEL_OK")
</pallas_src>

<mosaic_0001>
module attributes {stable_mosaic.version = 11 : i64} {
  func.func @_gaussian_noise_nn_kernel(%arg0: i32, %arg1: memref<8x2xf32, #tpu.memory_space<vmem>>, %arg2: memref<2x64xf32, #tpu.memory_space<vmem>>, %arg3: memref<1x64xf32, #tpu.memory_space<vmem>>, %arg4: memref<64x128xf32, #tpu.memory_space<vmem>>, %arg5: memref<1x128xf32, #tpu.memory_space<vmem>>, %arg6: memref<128x512xf32, #tpu.memory_space<vmem>>, %arg7: memref<1x512xf32, #tpu.memory_space<vmem>>, %arg8: memref<128x128xf32, #tpu.memory_space<vmem>>, %arg9: memref<8x512xf32, #tpu.memory_space<vmem>>) attributes {dimension_semantics = [#tpu.dimension_semantics<parallel>], iteration_bounds = array<i64: 1>, scalar_prefetch = 0 : i64, scratch_operands = 0 : i64, tpu.core_type = #tpu.core_type<tc>, window_params = [{transform_indices = @transform_0, window_bounds = array<i64: 8, 2>}, {pipeline_mode = #tpu.pipeline_mode<synchronous>, transform_indices = @transform_1, window_bounds = array<i64: 2, 64>}, {pipeline_mode = #tpu.pipeline_mode<synchronous>, transform_indices = @transform_2, window_bounds = array<i64: 1, 64>}, {pipeline_mode = #tpu.pipeline_mode<synchronous>, transform_indices = @transform_3, window_bounds = array<i64: 64, 128>}, {pipeline_mode = #tpu.pipeline_mode<synchronous>, transform_indices = @transform_4, window_bounds = array<i64: 1, 128>}, {pipeline_mode = #tpu.pipeline_mode<synchronous>, transform_indices = @transform_5, window_bounds = array<i64: 128, 512>}, {pipeline_mode = #tpu.pipeline_mode<synchronous>, transform_indices = @transform_6, window_bounds = array<i64: 1, 512>}, {pipeline_mode = #tpu.pipeline_mode<synchronous>, transform_indices = @transform_7, window_bounds = array<i64: 128, 128>}, {transform_indices = @transform_8, window_bounds = array<i64: 8, 512>}]} {
    %c0 = arith.constant 0 : index
    %c0_0 = arith.constant 0 : index
    %0 = vector.load %arg1[%c0, %c0_0] : memref<8x2xf32, #tpu.memory_space<vmem>>, vector<8x2xf32>
    %c0_1 = arith.constant 0 : index
    %c0_2 = arith.constant 0 : index
    %1 = vector.load %arg2[%c0_1, %c0_2] : memref<2x64xf32, #tpu.memory_space<vmem>>, vector<2x64xf32>
    %cst = arith.constant dense<0.000000e+00> : vector<8x64xf32>
    %2 = tpu.matmul %0, %1, %cst {dimension_numbers = #tpu.dot_dimension_numbers<[1], [0], [0], [1], [0, 0, 1, 1], [], []>} : vector<8x2xf32>, vector<2x64xf32>, vector<8x64xf32> -> vector<8x64xf32>
    %c0_3 = arith.constant 0 : index
    %c0_4 = arith.constant 0 : index
    %3 = vector.load %arg3[%c0_3, %c0_4] : memref<1x64xf32, #tpu.memory_space<vmem>>, vector<1x64xf32>
    %4 = vector.broadcast %3 : vector<1x64xf32> to vector<8x64xf32>
    %5 = arith.addf %2, %4 : vector<8x64xf32>
    %cst_5 = arith.constant 0.000000e+00 : f32
    %6 = vector.broadcast %cst_5 : f32 to vector<8x64xf32>
    %7 = arith.maximumf %5, %6 : vector<8x64xf32>
    %c0_6 = arith.constant 0 : index
    %c0_7 = arith.constant 0 : index
    %8 = vector.load %arg4[%c0_6, %c0_7] : memref<64x128xf32, #tpu.memory_space<vmem>>, vector<64x128xf32>
    %cst_8 = arith.constant dense<0.000000e+00> : vector<8x128xf32>
    %9 = tpu.matmul %7, %8, %cst_8 {dimension_numbers = #tpu.dot_dimension_numbers<[1], [0], [0], [1], [0, 0, 1, 1], [], []>} : vector<8x64xf32>, vector<64x128xf32>, vector<8x128xf32> -> vector<8x128xf32>
    %c0_9 = arith.constant 0 : index
    %c0_10 = arith.constant 0 : index
    %10 = vector.load %arg5[%c0_9, %c0_10] : memref<1x128xf32, #tpu.memory_space<vmem>>, vector<1x128xf32>
    %11 = vector.broadcast %10 : vector<1x128xf32> to vector<8x128xf32>
    %12 = arith.addf %9, %11 : vector<8x128xf32>
    %cst_11 = arith.constant 0.000000e+00 : f32
    %13 = vector.broadcast %cst_11 : f32 to vector<8x128xf32>
    %14 = arith.maximumf %12, %13 : vector<8x128xf32>
    %c0_12 = arith.constant 0 : index
    %c0_13 = arith.constant 0 : index
    %15 = vector.load %arg6[%c0_12, %c0_13] : memref<128x512xf32, #tpu.memory_space<vmem>>, vector<128x512xf32>
    %cst_14 = arith.constant dense<0.000000e+00> : vector<8x512xf32>
    %16 = tpu.matmul %14, %15, %cst_14 {dimension_numbers = #tpu.dot_dimension_numbers<[1], [0], [0], [1], [0, 0, 1, 1], [], []>} : vector<8x128xf32>, vector<128x512xf32>, vector<8x512xf32> -> vector<8x512xf32>
    %c0_15 = arith.constant 0 : index
    %c0_16 = arith.constant 0 : index
    %17 = vector.load %arg7[%c0_15, %c0_16] : memref<1x512xf32, #tpu.memory_space<vmem>>, vector<1x512xf32>
    %18 = vector.broadcast %17 : vector<1x512xf32> to vector<8x512xf32>
    %19 = arith.addf %16, %18 : vector<8x512xf32>
    %cst_17 = arith.constant dense<0xFF800000> : vector<8xf32>
    %20 = vector.multi_reduction <maximumf>, %19, %cst_17 [1] : vector<8x512xf32> to vector<8xf32>
    %21 = vector.shape_cast %20 : vector<8xf32> to vector<8x1xf32>
    %22 = vector.broadcast %21 : vector<8x1xf32> to vector<8x512xf32>
    %23 = arith.subf %19, %22 : vector<8x512xf32>
    %24 = math.exp %23 : vector<8x512xf32>
    %cst_18 = arith.constant dense<0.000000e+00> : vector<8xf32>
    %25 = vector.multi_reduction <add>, %24, %cst_18 [1] : vector<8x512xf32> to vector<8xf32>
    %26 = vector.shape_cast %25 : vector<8xf32> to vector<8x1xf32>
    %27 = vector.broadcast %26 : vector<8x1xf32> to vector<8x512xf32>
    %28 = arith.divf %24, %27 : vector<8x512xf32>
    %c0_19 = arith.constant 0 : index
    %c0_20 = arith.constant 0 : index
    %29 = vector.load %arg8[%c0_19, %c0_20] : memref<128x128xf32, #tpu.memory_space<vmem>>, vector<128x128xf32>
    %cst_21 = arith.constant 0.000000e+00 : f32
    %30 = vector.broadcast %cst_21 : f32 to vector<8x1xf32>
    %31 = vector.extract_strided_slice %28 {offsets = [0, 0], sizes = [8, 128], strides = [1, 1]} : vector<8x512xf32> to vector<8x128xf32>
    %cst_22 = arith.constant dense<0.000000e+00> : vector<8x128xf32>
    %32 = tpu.matmul %31, %29, %cst_22 {dimension_numbers = #tpu.dot_dimension_numbers<[1], [0], [0], [1], [0, 0, 1, 1], [], []>} : vector<8x128xf32>, vector<128x128xf32>, vector<8x128xf32> -> vector<8x128xf32>
    %33 = vector.broadcast %30 : vector<8x1xf32> to vector<8x128xf32>
    %34 = arith.addf %32, %33 : vector<8x128xf32>
    %c0_23 = arith.constant 0 : index
    %c0_24 = arith.constant 0 : index
    %35 = vector.load %arg9[%c0_23, %c0_24] : memref<8x512xf32, #tpu.memory_space<vmem>>, vector<8x128xf32>
    tpu.vector_store %arg9[%c0_23, %c0_24], %34 {strides = array<i32>} : memref<8x512xf32, #tpu.memory_space<vmem>>, vector<8x128xf32>,
    %36 = vector.extract_strided_slice %34 {offsets = [0, 127], sizes = [8, 1], strides = [1, 1]} : vector<8x128xf32> to vector<8x1xf32>
    %37 = vector.extract_strided_slice %28 {offsets = [0, 128], sizes = [8, 128], strides = [1, 1]} : vector<8x512xf32> to vector<8x128xf32>
    %cst_25 = arith.constant dense<0.000000e+00> : vector<8x128xf32>
    %38 = tpu.matmul %37, %29, %cst_25 {dimension_numbers = #tpu.dot_dimension_numbers<[1], [0], [0], [1], [0, 0, 1, 1], [], []>} : vector<8x128xf32>, vector<128x128xf32>, vector<8x128xf32> -> vector<8x128xf32>
    %39 = vector.broadcast %36 : vector<8x1xf32> to vector<8x128xf32>
    %40 = arith.addf %38, %39 : vector<8x128xf32>
    %c0_26 = arith.constant 0 : index
    %c128 = arith.constant 128 : index
    %41 = vector.load %arg9[%c0_26, %c128] : memref<8x512xf32, #tpu.memory_space<vmem>>, vector<8x128xf32>
    tpu.vector_store %arg9[%c0_26, %c128], %40 {strides = array<i32>} : memref<8x512xf32, #tpu.memory_space<vmem>>, vector<8x128xf32>,
    %42 = vector.extract_strided_slice %40 {offsets = [0, 127], sizes = [8, 1], strides = [1, 1]} : vector<8x128xf32> to vector<8x1xf32>
    %43 = vector.extract_strided_slice %28 {offsets = [0, 256], sizes = [8, 128], strides = [1, 1]} : vector<8x512xf32> to vector<8x128xf32>
    %cst_27 = arith.constant dense<0.000000e+00> : vector<8x128xf32>
    %44 = tpu.matmul %43, %29, %cst_27 {dimension_numbers = #tpu.dot_dimension_numbers<[1], [0], [0], [1], [0, 0, 1, 1], [], []>} : vector<8x128xf32>, vector<128x128xf32>, vector<8x128xf32> -> vector<8x128xf32>
    %45 = vector.broadcast %42 : vector<8x1xf32> to vector<8x128xf32>
    %46 = arith.addf %44, %45 : vector<8x128xf32>
    %c0_28 = arith.constant 0 : index
    %c256 = arith.constant 256 : index
    %47 = vector.load %arg9[%c0_28, %c256] : memref<8x512xf32, #tpu.memory_space<vmem>>, vector<8x128xf32>
    tpu.vector_store %arg9[%c0_28, %c256], %46 {strides = array<i32>} : memref<8x512xf32, #tpu.memory_space<vmem>>, vector<8x128xf32>,
    %48 = vector.extract_strided_slice %46 {offsets = [0, 127], sizes = [8, 1], strides = [1, 1]} : vector<8x128xf32> to vector<8x1xf32>
    %49 = vector.extract_strided_slice %28 {offsets = [0, 384], sizes = [8, 128], strides = [1, 1]} : vector<8x512xf32> to vector<8x128xf32>
    %cst_29 = arith.constant dense<0.000000e+00> : vector<8x128xf32>
    %50 = tpu.matmul %49, %29, %cst_29 {dimension_numbers = #tpu.dot_dimension_numbers<[1], [0], [0], [1], [0, 0, 1, 1], [], []>} : vector<8x128xf32>, vector<128x128xf32>, vector<8x128xf32> -> vector<8x128xf32>
    %51 = vector.broadcast %48 : vector<8x1xf32> to vector<8x128xf32>
    %52 = arith.addf %50, %51 : vector<8x128xf32>
    %c0_30 = arith.constant 0 : index
    %c384 = arith.constant 384 : index
    %53 = vector.load %arg9[%c0_30, %c384] : memref<8x512xf32, #tpu.memory_space<vmem>>, vector<8x128xf32>
    tpu.vector_store %arg9[%c0_30, %c384], %52 {strides = array<i32>} : memref<8x512xf32, #tpu.memory_space<vmem>>, vector<8x128xf32>,
    return
  }
  func.func @transform_0(%arg0: i32) -> (i32, i32) {
    %c0_i32 = arith.constant 0 : i32
    %c0_i32_0 = arith.constant 0 : i32
    return %arg0, %c0_i32 : i32, i32
  }
  func.func @transform_1(%arg0: i32) -> (i32, i32) {
    %c0_i32 = arith.constant 0 : i32
    %c0_i32_0 = arith.constant 0 : i32
    %c0_i32_1 = arith.constant 0 : i32
    return %c0_i32, %c0_i32_0 : i32, i32
  }
  func.func @transform_2(%arg0: i32) -> (i32, i32) {
    %c0_i32 = arith.constant 0 : i32
    %c0_i32_0 = arith.constant 0 : i32
    %c0_i32_1 = arith.constant 0 : i32
    return %c0_i32, %c0_i32_0 : i32, i32
  }
  func.func @transform_3(%arg0: i32) -> (i32, i32) {
    %c0_i32 = arith.constant 0 : i32
    %c0_i32_0 = arith.constant 0 : i32
    %c0_i32_1 = arith.constant 0 : i32
    return %c0_i32, %c0_i32_0 : i32, i32
  }
  func.func @transform_4(%arg0: i32) -> (i32, i32) {
    %c0_i32 = arith.constant 0 : i32
    %c0_i32_0 = arith.constant 0 : i32
    %c0_i32_1 = arith.constant 0 : i32
    return %c0_i32, %c0_i32_0 : i32, i32
  }
  func.func @transform_5(%arg0: i32) -> (i32, i32) {
    %c0_i32 = arith.constant 0 : i32
    %c0_i32_0 = arith.constant 0 : i32
    %c0_i32_1 = arith.constant 0 : i32
    return %c0_i32, %c0_i32_0 : i32, i32
  }
  func.func @transform_6(%arg0: i32) -> (i32, i32) {
    %c0_i32 = arith.constant 0 : i32
    %c0_i32_0 = arith.constant 0 : i32
    %c0_i32_1 = arith.constant 0 : i32
    return %c0_i32, %c0_i32_0 : i32, i32
  }
  func.func @transform_7(%arg0: i32) -> (i32, i32) {
    %c0_i32 = arith.constant 0 : i32
    %c0_i32_0 = arith.constant 0 : i32
    %c0_i32_1 = arith.constant 0 : i32
    return %c0_i32, %c0_i32_0 : i32, i32
  }
  func.func @transform_8(%arg0: i32) -> (i32, i32) {
    %c0_i32 = arith.constant 0 : i32
    %c0_i32_0 = arith.constant 0 : i32
    return %arg0, %c0_i32 : i32, i32
  }
}

</mosaic_0001>

<llo_original>
// kernel: gaussian_noise_nn_forward.1
$region0: #{gaussian_noise_nn_forward.1}
  #allocation0 [shape = 'u32[]', space=smem, size = 0x4, offset = 0x4, fixed_abs, tag = 'smem constant byte address 0x4 - core index']
  #allocation1 [shape = 'u32[144,128]{1,0:T(1,128)}', space=vmem, size = 0x12000, scoped, tag = 'internal scratch']
  %s0 = inlined_call_operand.vmem [shape: f32[8,2], index: 0, kind: input, shape index: {}]
  %s1 = inlined_call_operand.vmem [shape: f32[2,64], index: 1, kind: input, shape index: {}]
  %s2 = inlined_call_operand.vmem [shape: f32[1,64], index: 2, kind: input, shape index: {}]
  %s3 = inlined_call_operand.hbm [shape: f32[64,128], index: 3, kind: input, shape index: {}]
  %s4 = inlined_call_operand.vmem [shape: f32[1,128], index: 4, kind: input, shape index: {}]
  %s5 = inlined_call_operand.hbm [shape: f32[128,512], index: 5, kind: input, shape index: {}]
  %s6 = inlined_call_operand.vmem [shape: f32[1,512], index: 6, kind: input, shape index: {}]
  %s7 = inlined_call_operand.hbm [shape: f32[128,128], index: 7, kind: input, shape index: {}]
  %s8 = inlined_call_operand.hbm [shape: f32[8,512], index: 8, kind: output, shape index: {}]
  %s9 = sld [smem:[#allocation0]]
  $region54: #{gaussian_noise_nn_forward.1} parent=0
    _
  %s11 = ssub.s32 1, %s9
  %s12 = scalar_select 0, %s11, %s9
  $region1: #{gaussian_noise_nn_forward.1} parent=0
    #allocation2 [shape = 'u8[32768]{0}', space=vmem, size = 0x8000, scoped, tag = 'input window, operand 3, single buffered']
    #allocation3 [shape = 's32[1]{0}', space=sflag, size = 0x4, scoped, tag = 'scoped memory for gaussian_noise_nn_forward.1']
    #allocation4 [shape = 's32[1]{0}', space=sflag, size = 0x4, scoped, tag = 'scoped memory for gaussian_noise_nn_forward.1']
    #allocation5 [shape = 'u8[262144]{0}', space=vmem, size = 0x40000, scoped, tag = 'input window, operand 5, single buffered']
    #allocation6 [shape = 's32[1]{0}', space=sflag, size = 0x4, scoped, tag = 'scoped memory for gaussian_noise_nn_forward.1']
    #allocation7 [shape = 'u8[65536]{0}', space=vmem, size = 0x10000, scoped, tag = 'input window, operand 7, single buffered']
    #allocation8 [shape = 'u8[16384]{0}', space=vmem, size = 0x4000, scoped, tag = 'output window, operand 0, single buffered']
    %13 = vsyncpa [#allocation3], 0
    %14 = vsyncpa [#allocation6], 0
    %15 = vsyncpa [#allocation4], 0
    // Predicated region
    $region2: #{gaussian_noise_nn_forward.1} parent=1 // pred_check
      _
    $region3: #{gaussian_noise_nn_forward.1} parent=1 // pred_check_branch
      %17 = sbr.rel (0) target = $region5
    $region4: #{gaussian_noise_nn_forward.1} parent=1 // pred_region
      _
    $region5: #{gaussian_noise_nn_forward.1} parent=1 // pred_fallthru
      _
    // Predicated region
    $region6: #{gaussian_noise_nn_forward.1} parent=1 // pred_check
      _
    $region7: #{gaussian_noise_nn_forward.1} parent=1 // pred_check_branch
      %19 = sbr.rel (0) target = $region9
    $region8: #{gaussian_noise_nn_forward.1} parent=1 // pred_region
      _
    $region9: #{gaussian_noise_nn_forward.1} parent=1 // pred_fallthru
      _
    // Predicated region
    $region10: #{gaussian_noise_nn_forward.1} parent=1 // pred_check
      _
    $region11: #{gaussian_noise_nn_forward.1} parent=1 // pred_check_branch
      %21 = sbr.rel (0) target = $region13
    $region12: #{gaussian_noise_nn_forward.1} parent=1 // pred_region
      _
    $region13: #{gaussian_noise_nn_forward.1} parent=1 // pred_fallthru
      _
    // Predicated region
    $region14: #{gaussian_noise_nn_forward.1} parent=1 // pred_check
      _
    $region15: #{gaussian_noise_nn_forward.1} parent=1 // pred_check_branch
      %23 = sbr.rel (0) target = $region17
    $region16: #{gaussian_noise_nn_forward.1} parent=1 // pred_region
      %s25 = ssub.s32 1024, 1024
      %26 = vsyncadd [#allocation3], %s25
      %s27 = sshll.u32 [#allocation2], 4
      %s28 = int_to_ptr.vmem [resolvable:$true] %s27
      %33 = dma.hbm_to_vmem [thread:$0]  %s3, 1024, %s28, [#allocation3], 128, 128, 8
    $region17: #{gaussian_noise_nn_forward.1} parent=1 // pred_fallthru
      _
    // Predicated region
    $region18: #{gaussian_noise_nn_forward.1} parent=1 // pred_check
      _
    $region19: #{gaussian_noise_nn_forward.1} parent=1 // pred_check_branch
      %35 = sbr.rel (0) target = $region21
    $region20: #{gaussian_noise_nn_forward.1} parent=1 // pred_region
      _
    $region21: #{gaussian_noise_nn_forward.1} parent=1 // pred_fallthru
      _
    // Predicated region
    $region22: #{gaussian_noise_nn_forward.1} parent=1 // pred_check
      _
    $region23: #{gaussian_noise_nn_forward.1} parent=1 // pred_check_branch
      %37 = sbr.rel (0) target = $region25
    $region24: #{gaussian_noise_nn_forward.1} parent=1 // pred_region
      %s39 = ssub.s32 8192, 8192
      %40 = vsyncadd [#allocation6], %s39
      %s41 = sshll.u32 [#allocation5], 4
      %s42 = int_to_ptr.vmem [resolvable:$true] %s41
      %47 = dma.hbm_to_vmem [thread:$0]  %s5, 8192, %s42, [#allocation6], 512, 512, 32
    $region25: #{gaussian_noise_nn_forward.1} parent=1 // pred_fallthru
      _
    // Predicated region
    $region26: #{gaussian_noise_nn_forward.1} parent=1 // pred_check
      _
    $region27: #{gaussian_noise_nn_forward.1} parent=1 // pred_check_branch
      %49 = sbr.rel (0) target = $region29
    $region28: #{gaussian_noise_nn_forward.1} parent=1 // pred_region
      _
    $region29: #{gaussian_noise_nn_forward.1} parent=1 // pred_fallthru
      _
    // Predicated region
    $region30: #{gaussian_noise_nn_forward.1} parent=1 // pred_check
      _
    $region31: #{gaussian_noise_nn_forward.1} parent=1 // pred_check_branch
      %51 = sbr.rel (0) target = $region33
    $region32: #{gaussian_noise_nn_forward.1} parent=1 // pred_region
      %s53 = ssub.s32 2048, 2048
      %54 = vsyncadd [#allocation6], %s53
      %s55 = sshll.u32 [#allocation7], 4
      %s56 = int_to_ptr.vmem [resolvable:$true] %s55
      %61 = dma.hbm_to_vmem [thread:$0]  %s7, 2048, %s56, [#allocation6], 128, 128, 8
    $region33: #{gaussian_noise_nn_forward.1} parent=1 // pred_fallthru
      _
    // Predicated region
    $region34: #{gaussian_noise_nn_forward.1} parent=1 // pred_check
      _
    $region35: #{gaussian_noise_nn_forward.1} parent=1 // pred_check_branch
      %63 = sbr.rel (0) target = $region37
    $region36: #{gaussian_noise_nn_forward.1} parent=1 // pred_region
      %64 = dma.done [#allocation3], 1024
    $region37: #{gaussian_noise_nn_forward.1} parent=1 // pred_fallthru
      _
    // Predicated region
    $region38: #{gaussian_noise_nn_forward.1} parent=1 // pred_check
      _
    $region39: #{gaussian_noise_nn_forward.1} parent=1 // pred_check_branch
      %66 = sbr.rel (0) target = $region41
    $region40: #{gaussian_noise_nn_forward.1} parent=1 // pred_region
      %67 = dma.done [#allocation6], 8192
    $region41: #{gaussian_noise_nn_forward.1} parent=1 // pred_fallthru
      _
    // Predicated region
    $region42: #{gaussian_noise_nn_forward.1} parent=1 // pred_check
      _
    $region43: #{gaussian_noise_nn_forward.1} parent=1 // pred_check_branch
      %69 = sbr.rel (0) target = $region45
    $region44: #{gaussian_noise_nn_forward.1} parent=1 // pred_region
      %70 = dma.done [#allocation6], 2048
    $region45: #{gaussian_noise_nn_forward.1} parent=1 // pred_fallthru
      _
    %v71 = vld [vmem:[%s0] sm:$0xff]
    %v72 = vld [vmem:[%s1] sm:$0x3]
    %v73 = vld [vmem:[%s2] sm:$0x1]
    %v75 = vlaneseq
    %v76 = vshrl.u32 %v75, 7
    %v77 = vsub.s32 0, %v76
    %v78 = vrot.slane %v73, %v77
    %vm80 = vcmask 15360
    %v82 = vsel %vm80, %v71, 0
    %vm84 = vcmask 1041408
    %v86 = vsel %vm84, %v72, 0
    %88 = vmatprep.subr.mxu0 0.0
    %89 = vmatpush1.msra.mxu0 0.0
    %90 = vmatprep.subr.mxu0 0.0
    %91 = vmatpush1.msra.mxu0 0.0
    %92 = vmatprep.subr.mxu0 0.0
    %93 = vmatpush1.msra.mxu0 0.0
    %94 = vmatprep.subr.mxu0 0.0
    %95 = vmatpush1.msra.mxu0 0.0
    %96 = vmatprep.subr.mxu0 0.0
    %97 = vmatpush1.msra.mxu0 0.0
    %98 = vmatprep.subr.mxu0 0.0
    %99 = vmatpush1.msra.mxu0 0.0
    %100 = vmatprep.subr.mxu0 0.0
    %101 = vmatpush1.msra.mxu0 0.0
    %102 = vmatprep.subr.mxu0 0.0
    %103 = vmatpush1.msra.mxu0 0.0
    %104 = vmatprep.subr.mxu0 0.0
    %105 = vmatpush1.msra.mxu0 0.0
    %106 = vmatprep.subr.mxu0 0.0
    %107 = vmatpush1.msra.mxu0 0.0
    %108 = vmatprep.subr.mxu0 0.0
    %109 = vmatpush1.msra.mxu0 0.0
    %110 = vmatprep.subr.mxu0 0.0
    %111 = vmatpush1.msra.mxu0 0.0
    %112 = vmatprep.subr.mxu0 0.0
    %113 = vmatpush1.msra.mxu0 0.0
    %114 = vmatprep.subr.mxu0 0.0
    %115 = vmatpush1.msra.mxu0 0.0
    %116 = vmatprep.subr.mxu0 0.0
    %117 = vmatpush1.msra.mxu0 0.0
    %118 = vmatprep.subr.mxu0 0.0
    %119 = vmatpush1.msra.mxu0 %v86
    %120 = vmatprep.subr.mxu0 0.0
    %121 = vmatpush2.msra.mxu0 0.0
    %122 = vmatprep.subr.mxu0 0.0
    %123 = vmatpush2.msra.mxu0 0.0
    %124 = vmatprep.subr.mxu0 0.0
    %125 = vmatpush2.msra.mxu0 0.0
    %126 = vmatprep.subr.mxu0 0.0
    %127 = vmatpush2.msra.mxu0 0.0
    %128 = vmatprep.subr.mxu0 0.0
    %129 = vmatpush2.msra.mxu0 0.0
    %130 = vmatprep.subr.mxu0 0.0
    %131 = vmatpush2.msra.mxu0 0.0
    %132 = vmatprep.subr.mxu0 0.0
    %133 = vmatpush2.msra.mxu0 0.0
    %134 = vmatprep.subr.mxu0 0.0
    %135 = vmatpush2.msra.mxu0 0.0
    %136 = vmatprep.subr.mxu0 0.0
    %137 = vmatpush2.msra.mxu0 0.0
    %138 = vmatprep.subr.mxu0 0.0
    %139 = vmatpush2.msra.mxu0 0.0
    %140 = vmatprep.subr.mxu0 0.0
    %141 = vmatpush2.msra.mxu0 0.0
    %142 = vmatprep.subr.mxu0 0.0
    %143 = vmatpush2.msra.mxu0 0.0
    %144 = vmatprep.subr.mxu0 0.0
    %145 = vmatpush2.msra.mxu0 0.0
    %146 = vmatprep.subr.mxu0 0.0
    %147 = vmatpush2.msra.mxu0 0.0
    %148 = vmatprep.subr.mxu0 0.0
    %149 = vmatpush2.msra.mxu0 0.0
    %150 = vmatprep.subr.mxu0 0.0
    %151 = vmatpush2.msra.mxu0 0.0
    %152 = vmatprep.mubr.f32.mxu0 0.0
    %153 = vmatmul.mubr.f32.gmra.mxu0 %v82
    %v154 = vpop.f32.mrf.mxu0
    %v155 = vadd.f32 %v78, %v154
    %v156 = vpop.f32.mrf.mxu0
    %157 = vdwg.mxu0
    %v158 = vmax.f32 %v155, 0.0
    %v159 = vld [vmem:[#allocation2] sm:$0xff]
    %v160 = vld [vmem:[#allocation2 + $0x8] sm:$0xff]
    %v161 = vld [vmem:[#allocation2 + $0x10] sm:$0xff]
    %v162 = vld [vmem:[#allocation2 + $0x18] sm:$0xff]
    %v163 = vld [vmem:[#allocation2 + $0x20] sm:$0xff]
    %v164 = vld [vmem:[#allocation2 + $0x28] sm:$0xff]
    %v165 = vld [vmem:[#allocation2 + $0x30] sm:$0xff]
    %v166 = vld [vmem:[#allocation2 + $0x38] sm:$0xff]
    %v167 = vld [vmem:[%s4] sm:$0x1]
    %v169 = vlaneseq
    %v170 = vshrl.u32 %v169, 7
    %v171 = vsub.s32 0, %v170
    %v172 = vrot.slane %v167, %v171
    %vm174 = vcmask 523264
    %v176 = vsel %vm174, %v158, 0
    %178 = vmatprep.subr.mxu0 0.0
    %179 = vmatpush1.msra.mxu0 0.0
    %180 = vmatprep.subr.mxu0 0.0
    %181 = vmatpush1.msra.mxu0 0.0
    %182 = vmatprep.subr.mxu0 0.0
    %183 = vmatpush1.msra.mxu0 0.0
    %184 = vmatprep.subr.mxu0 0.0
    %185 = vmatpush1.msra.mxu0 0.0
    %186 = vmatprep.subr.mxu0 0.0
    %187 = vmatpush1.msra.mxu0 0.0
    %188 = vmatprep.subr.mxu0 0.0
    %189 = vmatpush1.msra.mxu0 0.0
    %190 = vmatprep.subr.mxu0 0.0
    %191 = vmatpush1.msra.mxu0 0.0
    %192 = vmatprep.subr.mxu0 0.0
    %193 = vmatpush1.msra.mxu0 0.0
    %194 = vmatprep.subr.mxu0 0.0
    %195 = vmatpush1.msra.mxu0 %v166
    %196 = vmatprep.subr.mxu0 0.0
    %197 = vmatpush1.msra.mxu0 %v165
    %198 = vmatprep.subr.mxu0 0.0
    %199 = vmatpush1.msra.mxu0 %v164
    %200 = vmatprep.subr.mxu0 0.0
    %201 = vmatpush1.msra.mxu0 %v163
    %202 = vmatprep.subr.mxu0 0.0
    %203 = vmatpush1.msra.mxu0 %v162
    %204 = vmatprep.subr.mxu0 0.0
    %205 = vmatpush1.msra.mxu0 %v161
    %206 = vmatprep.subr.mxu0 0.0
    %207 = vmatpush1.msra.mxu0 %v160
    %208 = vmatprep.subr.mxu0 0.0
    %209 = vmatpush1.msra.mxu0 %v159
    %210 = vmatprep.subr.mxu0 0.0
    %211 = vmatpush2.msra.mxu0 0.0
    %212 = vmatprep.subr.mxu0 0.0
    %213 = vmatpush2.msra.mxu0 0.0
    %214 = vmatprep.subr.mxu0 0.0
    %215 = vmatpush2.msra.mxu0 0.0
    %216 = vmatprep.subr.mxu0 0.0
    %217 = vmatpush2.msra.mxu0 0.0
    %218 = vmatprep.subr.mxu0 0.0
    %219 = vmatpush2.msra.mxu0 0.0
    %220 = vmatprep.subr.mxu0 0.0
    %221 = vmatpush2.msra.mxu0 0.0
    %222 = vmatprep.subr.mxu0 0.0
    %223 = vmatpush2.msra.mxu0 0.0
    %224 = vmatprep.subr.mxu0 0.0
    %225 = vmatpush2.msra.mxu0 0.0
    %226 = vmatprep.subr.mxu0 0.0
    %227 = vmatpush2.msra.mxu0 0.0
    %228 = vmatprep.subr.mxu0 0.0
    %229 = vmatpush2.msra.mxu0 0.0
    %230 = vmatprep.subr.mxu0 0.0
    %231 = vmatpush2.msra.mxu0 0.0
    %232 = vmatprep.subr.mxu0 0.0
    %233 = vmatpush2.msra.mxu0 0.0
    %234 = vmatprep.subr.mxu0 0.0
    %235 = vmatpush2.msra.mxu0 0.0
    %236 = vmatprep.subr.mxu0 0.0
    %237 = vmatpush2.msra.mxu0 0.0
    %238 = vmatprep.subr.mxu0 0.0
    %239 = vmatpush2.msra.mxu0 0.0
    %240 = vmatprep.subr.mxu0 0.0
    %241 = vmatpush2.msra.mxu0 0.0
    %242 = vmatprep.mubr.f32.mxu0 0.0
    %243 = vmatmul.mubr.f32.gmra.mxu0 %v176
    %v244 = vpop.f32.mrf.mxu0
    %v245 = vadd.f32 %v172, %v244
    %v246 = vpop.f32.mrf.mxu0
    %247 = vdwg.mxu0
    %v248 = vmax.f32 %v245, 0.0
    %v249 = vld [vmem:[#allocation5] sm:$0xff]
    %v250 = vld [vmem:[#allocation5 + $0x8] sm:$0xff]
    %v251 = vld [vmem:[#allocation5 + $0x10] sm:$0xff]
    %v252 = vld [vmem:[#allocation5 + $0x18] sm:$0xff]
    %v253 = vld [vmem:[#allocation5 + $0x20] sm:$0xff]
    %v254 = vld [vmem:[#allocation5 + $0x28] sm:$0xff]
    %v255 = vld [vmem:[#allocation5 + $0x30] sm:$0xff]
    %v256 = vld [vmem:[#allocation5 + $0x38] sm:$0xff]
    %v257 = vld [vmem:[#allocation5 + $0x40] sm:$0xff]
    %v258 = vld [vmem:[#allocation5 + $0x48] sm:$0xff]
    %v259 = vld [vmem:[#allocation5 + $0x50] sm:$0xff]
    %v260 = vld [vmem:[#allocation5 + $0x58] sm:$0xff]
    %v261 = vld [vmem:[#allocation5 + $0x60] sm:$0xff]
    %v262 = vld [vmem:[#allocation5 + $0x68] sm:$0xff]
    %v263 = vld [vmem:[#allocation5 + $0x70] sm:$0xff]
    %v264 = vld [vmem:[#allocation5 + $0x78] sm:$0xff]
    %v265 = vld [vmem:[#allocation5 + $0x80] sm:$0xff]
    %v266 = vld [vmem:[#allocation5 + $0x88] sm:$0xff]
    %v267 = vld [vmem:[#allocation5 + $0x90] sm:$0xff]
    %v268 = vld [vmem:[#allocation5 + $0x98] sm:$0xff]
    %v269 = vld [vmem:[#allocation5 + $0xa0] sm:$0xff]
    %v270 = vld [vmem:[#allocation5 + $0xa8] sm:$0xff]
    %v271 = vld [vmem:[#allocation5 + $0xb0] sm:$0xff]
    %v272 = vld [vmem:[#allocation5 + $0xb8] sm:$0xff]
    %v273 = vld [vmem:[#allocation5 + $0xc0] sm:$0xff]
    %v274 = vld [vmem:[#allocation5 + $0xc8] sm:$0xff]
    %v275 = vld [vmem:[#allocation5 + $0xd0] sm:$0xff]
    %v276 = vld [vmem:[#allocation5 + $0xd8] sm:$0xff]
    %v277 = vld [vmem:[#allocation5 + $0xe0] sm:$0xff]
    %v278 = vld [vmem:[#allocation5 + $0xe8] sm:$0xff]
    %v279 = vld [vmem:[#allocation5 + $0xf0] sm:$0xff]
    %v280 = vld [vmem:[#allocation5 + $0xf8] sm:$0xff]
    %v281 = vld [vmem:[#allocation5 + $0x100] sm:$0xff]
    %v282 = vld [vmem:[#allocation5 + $0x108] sm:$0xff]
    %v283 = vld [vmem:[#allocation5 + $0x110] sm:$0xff]
    %v284 = vld [vmem:[#allocation5 + $0x118] sm:$0xff]
    %v285 = vld [vmem:[#allocation5 + $0x120] sm:$0xff]
    %v286 = vld [vmem:[#allocation5 + $0x128] sm:$0xff]
    %v287 = vld [vmem:[#allocation5 + $0x130] sm:$0xff]
    %v288 = vld [vmem:[#allocation5 + $0x138] sm:$0xff]
    %v289 = vld [vmem:[#allocation5 + $0x140] sm:$0xff]
    %v290 = vld [vmem:[#allocation5 + $0x148] sm:$0xff]
    %v291 = vld [vmem:[#allocation5 + $0x150] sm:$0xff]
    %v292 = vld [vmem:[#allocation5 + $0x158] sm:$0xff]
    %v293 = vld [vmem:[#allocation5 + $0x160] sm:$0xff]
    %v294 = vld [vmem:[#allocation5 + $0x168] sm:$0xff]
    %v295 = vld [vmem:[#allocation5 + $0x170] sm:$0xff]
    %v296 = vld [vmem:[#allocation5 + $0x178] sm:$0xff]
    %v297 = vld [vmem:[#allocation5 + $0x180] sm:$0xff]
    %v298 = vld [vmem:[#allocation5 + $0x188] sm:$0xff]
    %v299 = vld [vmem:[#allocation5 + $0x190] sm:$0xff]
    %v300 = vld [vmem:[#allocation5 + $0x198] sm:$0xff]
    %v301 = vld [vmem:[#allocation5 + $0x1a0] sm:$0xff]
    %v302 = vld [vmem:[#allocation5 + $0x1a8] sm:$0xff]
    %v303 = vld [vmem:[#allocation5 + $0x1b0] sm:$0xff]
    %v304 = vld [vmem:[#allocation5 + $0x1b8] sm:$0xff]
    %v305 = vld [vmem:[#allocation5 + $0x1c0] sm:$0xff]
    %v306 = vld [vmem:[#allocation5 + $0x1c8] sm:$0xff]
    %v307 = vld [vmem:[#allocation5 + $0x1d0] sm:$0xff]
    %v308 = vld [vmem:[#allocation5 + $0x1d8] sm:$0xff]
    %v309 = vld [vmem:[#allocation5 + $0x1e0] sm:$0xff]
    %v310 = vld [vmem:[#allocation5 + $0x1e8] sm:$0xff]
    %v311 = vld [vmem:[#allocation5 + $0x1f0] sm:$0xff]
    %v312 = vld [vmem:[#allocation5 + $0x1f8] sm:$0xff]
    %v313 = vld [vmem:[%s6] sm:$0xf]
    %v315 = vlaneseq
    %v316 = vshrl.u32 %v315, 7
    %v317 = vsub.s32 0, %v316
    %v318 = vrot.slane %v313, %v317
    %v319 = vlaneseq
    %v320 = vshrl.u32 %v319, 7
    %v321 = vsub.s32 1, %v320
    %v322 = vrot.slane %v313, %v321
    %v323 = vlaneseq
    %v324 = vshrl.u32 %v323, 7
    %v325 = vsub.s32 2, %v324
    %v326 = vrot.slane %v313, %v325
    %v327 = vlaneseq
    %v328 = vshrl.u32 %v327, 7
    %v329 = vsub.s32 3, %v328
    %v330 = vrot.slane %v313, %v329
    %335 = vmatprep.subr.mxu0 %v310
    %336 = vmatpush1.msra.mxu0 %v309
    %337 = vmatprep.subr.mxu0 %v306
    %338 = vmatpush1.msra.mxu0 %v305
    %339 = vmatprep.subr.mxu0 %v302
    %340 = vmatpush1.msra.mxu0 %v301
    %341 = vmatprep.subr.mxu0 %v298
    %342 = vmatpush1.msra.mxu0 %v297
    %343 = vmatprep.subr.mxu0 %v294
    %344 = vmatpush1.msra.mxu0 %v293
    %345 = vmatprep.subr.mxu0 %v290
    %346 = vmatpush1.msra.mxu0 %v289
    %347 = vmatprep.subr.mxu0 %v286
    %348 = vmatpush1.msra.mxu0 %v285
    %349 = vmatprep.subr.mxu0 %v282
    %350 = vmatpush1.msra.mxu0 %v281
    %351 = vmatprep.subr.mxu0 %v278
    %352 = vmatpush1.msra.mxu0 %v277
    %353 = vmatprep.subr.mxu0 %v274
    %354 = vmatpush1.msra.mxu0 %v273
    %355 = vmatprep.subr.mxu0 %v270
    %356 = vmatpush1.msra.mxu0 %v269
    %357 = vmatprep.subr.mxu0 %v266
    %358 = vmatpush1.msra.mxu0 %v265
    %359 = vmatprep.subr.mxu0 %v262
    %360 = vmatpush1.msra.mxu0 %v261
    %361 = vmatprep.subr.mxu0 %v258
    %362 = vmatpush1.msra.mxu0 %v257
    %363 = vmatprep.subr.mxu0 %v254
    %364 = vmatpush1.msra.mxu0 %v253
    %365 = vmatprep.subr.mxu0 %v250
    %366 = vmatpush1.msra.mxu0 %v249
    %367 = vmatprep.subr.mxu0 0.0
    %368 = vmatpush2.msra.mxu0 0.0
    %369 = vmatprep.subr.mxu0 0.0
    %370 = vmatpush2.msra.mxu0 0.0
    %371 = vmatprep.subr.mxu0 0.0
    %372 = vmatpush2.msra.mxu0 0.0
    %373 = vmatprep.subr.mxu0 0.0
    %374 = vmatpush2.msra.mxu0 0.0
    %375 = vmatprep.subr.mxu0 0.0
    %376 = vmatpush2.msra.mxu0 0.0
    %377 = vmatprep.subr.mxu0 0.0
    %378 = vmatpush2.msra.mxu0 0.0
    %379 = vmatprep.subr.mxu0 0.0
    %380 = vmatpush2.msra.mxu0 0.0
    %381 = vmatprep.subr.mxu0 0.0
    %382 = vmatpush2.msra.mxu0 0.0
    %383 = vmatprep.subr.mxu0 0.0
    %384 = vmatpush2.msra.mxu0 0.0
    %385 = vmatprep.subr.mxu0 0.0
    %386 = vmatpush2.msra.mxu0 0.0
    %387 = vmatprep.subr.mxu0 0.0
    %388 = vmatpush2.msra.mxu0 0.0
    %389 = vmatprep.subr.mxu0 0.0
    %390 = vmatpush2.msra.mxu0 0.0
    %391 = vmatprep.subr.mxu0 0.0
    %392 = vmatpush2.msra.mxu0 0.0
    %393 = vmatprep.subr.mxu0 0.0
    %394 = vmatpush2.msra.mxu0 0.0
    %395 = vmatprep.subr.mxu0 0.0
    %396 = vmatpush2.msra.mxu0 0.0
    %397 = vmatprep.subr.mxu0 0.0
    %398 = vmatpush2.msra.mxu0 0.0
    %399 = vmatprep.mubr.f32.mxu0 0.0
    %400 = vmatmul.mubr.f32.gmra.mxu0 %v248
    %v401 = vpop.f32.mrf.mxu0
    %v402 = vadd.f32 %v318, %v401
    %v403 = vpop.f32.mrf.mxu0
    %v404 = vadd.f32 %v322, %v403
    %405 = vdwg.mxu0
    %406 = vmatprep.subr.mxu0 %v312
    %407 = vmatpush1.msra.mxu0 %v311
    %408 = vmatprep.subr.mxu0 %v308
    %409 = vmatpush1.msra.mxu0 %v307
    %410 = vmatprep.subr.mxu0 %v304
    %411 = vmatpush1.msra.mxu0 %v303
    %412 = vmatprep.subr.mxu0 %v300
    %413 = vmatpush1.msra.mxu0 %v299
    %414 = vmatprep.subr.mxu0 %v296
    %415 = vmatpush1.msra.mxu0 %v295
    %416 = vmatprep.subr.mxu0 %v292
    %417 = vmatpush1.msra.mxu0 %v291
    %418 = vmatprep.subr.mxu0 %v288
    %419 = vmatpush1.msra.mxu0 %v287
    %420 = vmatprep.subr.mxu0 %v284
    %421 = vmatpush1.msra.mxu0 %v283
    %422 = vmatprep.subr.mxu0 %v280
    %423 = vmatpush1.msra.mxu0 %v279
    %424 = vmatprep.subr.mxu0 %v276
    %425 = vmatpush1.msra.mxu0 %v275
    %426 = vmatprep.subr.mxu0 %v272
    %427 = vmatpush1.msra.mxu0 %v271
    %428 = vmatprep.subr.mxu0 %v268
    %429 = vmatpush1.msra.mxu0 %v267
    %430 = vmatprep.subr.mxu0 %v264
    %431 = vmatpush1.msra.mxu0 %v263
    %432 = vmatprep.subr.mxu0 %v260
    %433 = vmatpush1.msra.mxu0 %v259
    %434 = vmatprep.subr.mxu0 %v256
    %435 = vmatpush1.msra.mxu0 %v255
    %436 = vmatprep.subr.mxu0 %v252
    %437 = vmatpush1.msra.mxu0 %v251
    %438 = vmatprep.subr.mxu0 0.0
    %439 = vmatpush2.msra.mxu0 0.0
    %440 = vmatprep.subr.mxu0 0.0
    %441 = vmatpush2.msra.mxu0 0.0
    %442 = vmatprep.subr.mxu0 0.0
    %443 = vmatpush2.msra.mxu0 0.0
    %444 = vmatprep.subr.mxu0 0.0
    %445 = vmatpush2.msra.mxu0 0.0
    %446 = vmatprep.subr.mxu0 0.0
    %447 = vmatpush2.msra.mxu0 0.0
    %448 = vmatprep.subr.mxu0 0.0
    %449 = vmatpush2.msra.mxu0 0.0
    %450 = vmatprep.subr.mxu0 0.0
    %451 = vmatpush2.msra.mxu0 0.0
    %452 = vmatprep.subr.mxu0 0.0
    %453 = vmatpush2.msra.mxu0 0.0
    %454 = vmatprep.subr.mxu0 0.0
    %455 = vmatpush2.msra.mxu0 0.0
    %456 = vmatprep.subr.mxu0 0.0
    %457 = vmatpush2.msra.mxu0 0.0
    %458 = vmatprep.subr.mxu0 0.0
    %459 = vmatpush2.msra.mxu0 0.0
    %460 = vmatprep.subr.mxu0 0.0
    %461 = vmatpush2.msra.mxu0 0.0
    %462 = vmatprep.subr.mxu0 0.0
    %463 = vmatpush2.msra.mxu0 0.0
    %464 = vmatprep.subr.mxu0 0.0
    %465 = vmatpush2.msra.mxu0 0.0
    %466 = vmatprep.subr.mxu0 0.0
    %467 = vmatpush2.msra.mxu0 0.0
    %468 = vmatprep.subr.mxu0 0.0
    %469 = vmatpush2.msra.mxu0 0.0
    %470 = vmatprep.mubr.f32.mxu0 0.0
    %471 = vmatmul.mubr.f32.gmra.mxu0 %v248
    %v472 = vpop.f32.mrf.mxu0
    %v473 = vadd.f32 %v326, %v472
    %v474 = vpop.f32.mrf.mxu0
    %v475 = vadd.f32 %v330, %v474
    %476 = vdwg.mxu0
    %v477 = vmax.f32 %v402, %v404
    %v478 = vmax.f32 %v473, %v475
    %v479 = vmax.f32 %v477, %v478
    %480 = vmax.xlane.f32.xlu0 %v479
    %v481 = vpop.xlane.xlu0 %480
    %v482 = vsub.f32 %v402, %v481
    %v483 = vsub.f32 %v404, %v481
    %v484 = vsub.f32 %v473, %v481
    %v485 = vsub.f32 %v475, %v481
    %v486 = vmul.f32 %v482, 1.442695
    %v487 = vpow.pop %v486
    %v488 = vmul.f32 %v483, 1.442695
    %v489 = vpow.pop %v488
    %v490 = vmul.f32 %v484, 1.442695
    %v491 = vpow.pop %v490
    %v492 = vmul.f32 %v485, 1.442695
    %v493 = vpow.pop %v492
    %v494 = vadd.f32 %v487, %v489
    %v495 = vadd.f32 %v494, %v491
    %v496 = vadd.f32 %v495, %v493
    %497 = vadd.xlane.f32.xlu0 %v496
    %v498 = vpop.xlane.xlu0 %497
    %v499 = vrcp.pop %v498
    %v500 = vmul.f32 %v487, %v499
    %v501 = vmul.f32 %v489, %v499
    %v502 = vmul.f32 %v491, %v499
    %v503 = vmul.f32 %v493, %v499
    %v504 = vld [vmem:[#allocation7] sm:$0xff]
    %v505 = vld [vmem:[#allocation7 + $0x8] sm:$0xff]
    %v506 = vld [vmem:[#allocation7 + $0x10] sm:$0xff]
    %v507 = vld [vmem:[#allocation7 + $0x18] sm:$0xff]
    %v508 = vld [vmem:[#allocation7 + $0x20] sm:$0xff]
    %v509 = vld [vmem:[#allocation7 + $0x28] sm:$0xff]
    %v510 = vld [vmem:[#allocation7 + $0x30] sm:$0xff]
    %v511 = vld [vmem:[#allocation7 + $0x38] sm:$0xff]
    %v512 = vld [vmem:[#allocation7 + $0x40] sm:$0xff]
    %v513 = vld [vmem:[#allocation7 + $0x48] sm:$0xff]
    %v514 = vld [vmem:[#allocation7 + $0x50] sm:$0xff]
    %v515 = vld [vmem:[#allocation7 + $0x58] sm:$0xff]
    %v516 = vld [vmem:[#allocation7 + $0x60] sm:$0xff]
    %v517 = vld [vmem:[#allocation7 + $0x68] sm:$0xff]
    %v518 = vld [vmem:[#allocation7 + $0x70] sm:$0xff]
    %v519 = vld [vmem:[#allocation7 + $0x78] sm:$0xff]
    %520 = vmatprep.subr.mxu0 0.0
    %521 = vmatpush1.msra.mxu0 %v519
    %522 = vmatprep.subr.mxu0 0.0
    %523 = vmatpush1.msra.mxu0 %v518
    %524 = vmatprep.subr.mxu0 0.0
    %525 = vmatpush1.msra.mxu0 %v517
    %526 = vmatprep.subr.mxu0 0.0
    %527 = vmatpush1.msra.mxu0 %v516
    %528 = vmatprep.subr.mxu0 0.0
    %529 = vmatpush1.msra.mxu0 %v515
    %530 = vmatprep.subr.mxu0 0.0
    %531 = vmatpush1.msra.mxu0 %v514
    %532 = vmatprep.subr.mxu0 0.0
    %533 = vmatpush1.msra.mxu0 %v513
    %534 = vmatprep.subr.mxu0 0.0
    %535 = vmatpush1.msra.mxu0 %v512
    %536 = vmatprep.subr.mxu0 0.0
    %537 = vmatpush1.msra.mxu0 %v511
    %538 = vmatprep.subr.mxu0 0.0
    %539 = vmatpush1.msra.mxu0 %v510
    %540 = vmatprep.subr.mxu0 0.0
    %541 = vmatpush1.msra.mxu0 %v509
    %542 = vmatprep.subr.mxu0 0.0
    %543 = vmatpush1.msra.mxu0 %v508
    %544 = vmatprep.subr.mxu0 0.0
    %545 = vmatpush1.msra.mxu0 %v507
    %546 = vmatprep.subr.mxu0 0.0
    %547 = vmatpush1.msra.mxu0 %v506
    %548 = vmatprep.subr.mxu0 0.0
    %549 = vmatpush1.msra.mxu0 %v505
    %550 = vmatprep.subr.mxu0 0.0
    %551 = vmatpush1.msra.mxu0 %v504
    %552 = vmatprep.subr.mxu0 0.0
    %553 = vmatpush2.msra.mxu0 0.0
    %554 = vmatprep.subr.mxu0 0.0
    %555 = vmatpush2.msra.mxu0 0.0
    %556 = vmatprep.subr.mxu0 0.0
    %557 = vmatpush2.msra.mxu0 0.0
    %558 = vmatprep.subr.mxu0 0.0
    %559 = vmatpush2.msra.mxu0 0.0
    %560 = vmatprep.subr.mxu0 0.0
    %561 = vmatpush2.msra.mxu0 0.0
    %562 = vmatprep.subr.mxu0 0.0
    %563 = vmatpush2.msra.mxu0 0.0
    %564 = vmatprep.subr.mxu0 0.0
    %565 = vmatpush2.msra.mxu0 0.0
    %566 = vmatprep.subr.mxu0 0.0
    %567 = vmatpush2.msra.mxu0 0.0
    %568 = vmatprep.subr.mxu0 0.0
    %569 = vmatpush2.msra.mxu0 0.0
    %570 = vmatprep.subr.mxu0 0.0
    %571 = vmatpush2.msra.mxu0 0.0
    %572 = vmatprep.subr.mxu0 0.0
    %573 = vmatpush2.msra.mxu0 0.0
    %574 = vmatprep.subr.mxu0 0.0
    %575 = vmatpush2.msra.mxu0 0.0
    %576 = vmatprep.subr.mxu0 0.0
    %577 = vmatpush2.msra.mxu0 0.0
    %578 = vmatprep.subr.mxu0 0.0
    %579 = vmatpush2.msra.mxu0 0.0
    %580 = vmatprep.subr.mxu0 0.0
    %581 = vmatpush2.msra.mxu0 0.0
    %582 = vmatprep.subr.mxu0 0.0
    %583 = vmatpush2.msra.mxu0 0.0
    %584 = vmatprep.mubr.f32.mxu0 0.0
    %585 = vmatmul.mubr.f32.gmra.mxu0 %v500
    %v586 = vpop.f32.mrf.mxu0
    %v587 = vadd.f32 0.0, %v586
    %v588 = vpop.f32.mrf.mxu0
    %589 = vdwg.mxu0
    %590 = vst [vmem:[#allocation8] sm:$0xff] %v587
    %592 = vset.pattern.permute.xlu0 127
    %593 = vperm.xlu0 %592, %v587
    %v594 = vpop.permute.xlu0 %593
    %596 = vmatprep.subr.mxu0 0.0
    %597 = vmatpush1.msra.mxu0 %v519
    %598 = vmatprep.subr.mxu0 0.0
    %599 = vmatpush1.msra.mxu0 %v518
    %600 = vmatprep.subr.mxu0 0.0
    %601 = vmatpush1.msra.mxu0 %v517
    %602 = vmatprep.subr.mxu0 0.0
    %603 = vmatpush1.msra.mxu0 %v516
    %604 = vmatprep.subr.mxu0 0.0
    %605 = vmatpush1.msra.mxu0 %v515
    %606 = vmatprep.subr.mxu0 0.0
    %607 = vmatpush1.msra.mxu0 %v514
    %608 = vmatprep.subr.mxu0 0.0
    %609 = vmatpush1.msra.mxu0 %v513
    %610 = vmatprep.subr.mxu0 0.0
    %611 = vmatpush1.msra.mxu0 %v512
    %612 = vmatprep.subr.mxu0 0.0
    %613 = vmatpush1.msra.mxu0 %v511
    %614 = vmatprep.subr.mxu0 0.0
    %615 = vmatpush1.msra.mxu0 %v510
    %616 = vmatprep.subr.mxu0 0.0
    %617 = vmatpush1.msra.mxu0 %v509
    %618 = vmatprep.subr.mxu0 0.0
    %619 = vmatpush1.msra.mxu0 %v508
    %620 = vmatprep.subr.mxu0 0.0
    %621 = vmatpush1.msra.mxu0 %v507
    %622 = vmatprep.subr.mxu0 0.0
    %623 = vmatpush1.msra.mxu0 %v506
    %624 = vmatprep.subr.mxu0 0.0
    %625 = vmatpush1.msra.mxu0 %v505
    %626 = vmatprep.subr.mxu0 0.0
    %627 = vmatpush1.msra.mxu0 %v504
    %628 = vmatprep.subr.mxu0 0.0
    %629 = vmatpush2.msra.mxu0 0.0
    %630 = vmatprep.subr.mxu0 0.0
    %631 = vmatpush2.msra.mxu0 0.0
    %632 = vmatprep.subr.mxu0 0.0
    %633 = vmatpush2.msra.mxu0 0.0
    %634 = vmatprep.subr.mxu0 0.0
    %635 = vmatpush2.msra.mxu0 0.0
    %636 = vmatprep.subr.mxu0 0.0
    %637 = vmatpush2.msra.mxu0 0.0
    %638 = vmatprep.subr.mxu0 0.0
    %639 = vmatpush2.msra.mxu0 0.0
    %640 = vmatprep.subr.mxu0 0.0
    %641 = vmatpush2.msra.mxu0 0.0
    %642 = vmatprep.subr.mxu0 0.0
    %643 = vmatpush2.msra.mxu0 0.0
    %644 = vmatprep.subr.mxu0 0.0
    %645 = vmatpush2.msra.mxu0 0.0
    %646 = vmatprep.subr.mxu0 0.0
    %647 = vmatpush2.msra.mxu0 0.0
    %648 = vmatprep.subr.mxu0 0.0
    %649 = vmatpush2.msra.mxu0 0.0
    %650 = vmatprep.subr.mxu0 0.0
    %651 = vmatpush2.msra.mxu0 0.0
    %652 = vmatprep.subr.mxu0 0.0
    %653 = vmatpush2.msra.mxu0 0.0
    %654 = vmatprep.subr.mxu0 0.0
    %655 = vmatpush2.msra.mxu0 0.0
    %656 = vmatprep.subr.mxu0 0.0
    %657 = vmatpush2.msra.mxu0 0.0
    %658 = vmatprep.subr.mxu0 0.0
    %659 = vmatpush2.msra.mxu0 0.0
    %660 = vmatprep.mubr.f32.mxu0 0.0
    %661 = vmatmul.mubr.f32.gmra.mxu0 %v501
    %v662 = vpop.f32.mrf.mxu0
    %v663 = vadd.f32 %v594, %v662
    %v664 = vpop.f32.mrf.mxu0
    %665 = vdwg.mxu0
    %666 = vst [vmem:[#allocation8 + $0x8] sm:$0xff] %v663
    %668 = vset.pattern.permute.xlu0 127
    %669 = vperm.xlu0 %668, %v663
    %v670 = vpop.permute.xlu0 %669
    %672 = vmatprep.subr.mxu0 0.0
    %673 = vmatpush1.msra.mxu0 %v519
    %674 = vmatprep.subr.mxu0 0.0
    %675 = vmatpush1.msra.mxu0 %v518
    %676 = vmatprep.subr.mxu0 0.0
    %677 = vmatpush1.msra.mxu0 %v517
    %678 = vmatprep.subr.mxu0 0.0
    %679 = vmatpush1.msra.mxu0 %v516
    %680 = vmatprep.subr.mxu0 0.0
    %681 = vmatpush1.msra.mxu0 %v515
    %682 = vmatprep.subr.mxu0 0.0
    %683 = vmatpush1.msra.mxu0 %v514
    %684 = vmatprep.subr.mxu0 0.0
    %685 = vmatpush1.msra.mxu0 %v513
    %686 = vmatprep.subr.mxu0 0.0
    %687 = vmatpush1.msra.mxu0 %v512
    %688 = vmatprep.subr.mxu0 0.0
    %689 = vmatpush1.msra.mxu0 %v511
    %690 = vmatprep.subr.mxu0 0.0
    %691 = vmatpush1.msra.mxu0 %v510
    %692 = vmatprep.subr.mxu0 0.0
    %693 = vmatpush1.msra.mxu0 %v509
    %694 = vmatprep.subr.mxu0 0.0
    %695 = vmatpush1.msra.mxu0 %v508
    %696 = vmatprep.subr.mxu0 0.0
    %697 = vmatpush1.msra.mxu0 %v507
    %698 = vmatprep.subr.mxu0 0.0
    %699 = vmatpush1.msra.mxu0 %v506
    %700 = vmatprep.subr.mxu0 0.0
    %701 = vmatpush1.msra.mxu0 %v505
    %702 = vmatprep.subr.mxu0 0.0
    %703 = vmatpush1.msra.mxu0 %v504
    %704 = vmatprep.subr.mxu0 0.0
    %705 = vmatpush2.msra.mxu0 0.0
    %706 = vmatprep.subr.mxu0 0.0
    %707 = vmatpush2.msra.mxu0 0.0
    %708 = vmatprep.subr.mxu0 0.0
    %709 = vmatpush2.msra.mxu0 0.0
    %710 = vmatprep.subr.mxu0 0.0
    %711 = vmatpush2.msra.mxu0 0.0
    %712 = vmatprep.subr.mxu0 0.0
    %713 = vmatpush2.msra.mxu0 0.0
    %714 = vmatprep.subr.mxu0 0.0
    %715 = vmatpush2.msra.mxu0 0.0
    %716 = vmatprep.subr.mxu0 0.0
    %717 = vmatpush2.msra.mxu0 0.0
    %718 = vmatprep.subr.mxu0 0.0
    %719 = vmatpush2.msra.mxu0 0.0
    %720 = vmatprep.subr.mxu0 0.0
    %721 = vmatpush2.msra.mxu0 0.0
    %722 = vmatprep.subr.mxu0 0.0
    %723 = vmatpush2.msra.mxu0 0.0
    %724 = vmatprep.subr.mxu0 0.0
    %725 = vmatpush2.msra.mxu0 0.0
    %726 = vmatprep.subr.mxu0 0.0
    %727 = vmatpush2.msra.mxu0 0.0
    %728 = vmatprep.subr.mxu0 0.0
    %729 = vmatpush2.msra.mxu0 0.0
    %730 = vmatprep.subr.mxu0 0.0
    %731 = vmatpush2.msra.mxu0 0.0
    %732 = vmatprep.subr.mxu0 0.0
    %733 = vmatpush2.msra.mxu0 0.0
    %734 = vmatprep.subr.mxu0 0.0
    %735 = vmatpush2.msra.mxu0 0.0
    %736 = vmatprep.mubr.f32.mxu0 0.0
    %737 = vmatmul.mubr.f32.gmra.mxu0 %v502
    %v738 = vpop.f32.mrf.mxu0
    %v739 = vadd.f32 %v670, %v738
    %v740 = vpop.f32.mrf.mxu0
    %741 = vdwg.mxu0
    %742 = vst [vmem:[#allocation8 + $0x10] sm:$0xff] %v739
    %744 = vset.pattern.permute.xlu0 127
    %745 = vperm.xlu0 %744, %v739
    %v746 = vpop.permute.xlu0 %745
    %748 = vmatprep.subr.mxu0 0.0
    %749 = vmatpush1.msra.mxu0 %v519
    %750 = vmatprep.subr.mxu0 0.0
    %751 = vmatpush1.msra.mxu0 %v518
    %752 = vmatprep.subr.mxu0 0.0
    %753 = vmatpush1.msra.mxu0 %v517
    %754 = vmatprep.subr.mxu0 0.0
    %755 = vmatpush1.msra.mxu0 %v516
    %756 = vmatprep.subr.mxu0 0.0
    %757 = vmatpush1.msra.mxu0 %v515
    %758 = vmatprep.subr.mxu0 0.0
    %759 = vmatpush1.msra.mxu0 %v514
    %760 = vmatprep.subr.mxu0 0.0
    %761 = vmatpush1.msra.mxu0 %v513
    %762 = vmatprep.subr.mxu0 0.0
    %763 = vmatpush1.msra.mxu0 %v512
    %764 = vmatprep.subr.mxu0 0.0
    %765 = vmatpush1.msra.mxu0 %v511
    %766 = vmatprep.subr.mxu0 0.0
    %767 = vmatpush1.msra.mxu0 %v510
    %768 = vmatprep.subr.mxu0 0.0
    %769 = vmatpush1.msra.mxu0 %v509
    %770 = vmatprep.subr.mxu0 0.0
    %771 = vmatpush1.msra.mxu0 %v508
    %772 = vmatprep.subr.mxu0 0.0
    %773 = vmatpush1.msra.mxu0 %v507
    %774 = vmatprep.subr.mxu0 0.0
    %775 = vmatpush1.msra.mxu0 %v506
    %776 = vmatprep.subr.mxu0 0.0
    %777 = vmatpush1.msra.mxu0 %v505
    %778 = vmatprep.subr.mxu0 0.0
    %779 = vmatpush1.msra.mxu0 %v504
    %780 = vmatprep.subr.mxu0 0.0
    %781 = vmatpush2.msra.mxu0 0.0
    %782 = vmatprep.subr.mxu0 0.0
    %783 = vmatpush2.msra.mxu0 0.0
    %784 = vmatprep.subr.mxu0 0.0
    %785 = vmatpush2.msra.mxu0 0.0
    %786 = vmatprep.subr.mxu0 0.0
    %787 = vmatpush2.msra.mxu0 0.0
    %788 = vmatprep.subr.mxu0 0.0
    %789 = vmatpush2.msra.mxu0 0.0
    %790 = vmatprep.subr.mxu0 0.0
    %791 = vmatpush2.msra.mxu0 0.0
    %792 = vmatprep.subr.mxu0 0.0
    %793 = vmatpush2.msra.mxu0 0.0
    %794 = vmatprep.subr.mxu0 0.0
    %795 = vmatpush2.msra.mxu0 0.0
    %796 = vmatprep.subr.mxu0 0.0
    %797 = vmatpush2.msra.mxu0 0.0
    %798 = vmatprep.subr.mxu0 0.0
    %799 = vmatpush2.msra.mxu0 0.0
    %800 = vmatprep.subr.mxu0 0.0
    %801 = vmatpush2.msra.mxu0 0.0
    %802 = vmatprep.subr.mxu0 0.0
    %803 = vmatpush2.msra.mxu0 0.0
    %804 = vmatprep.subr.mxu0 0.0
    %805 = vmatpush2.msra.mxu0 0.0
    %806 = vmatprep.subr.mxu0 0.0
    %807 = vmatpush2.msra.mxu0 0.0
    %808 = vmatprep.subr.mxu0 0.0
    %809 = vmatpush2.msra.mxu0 0.0
    %810 = vmatprep.subr.mxu0 0.0
    %811 = vmatpush2.msra.mxu0 0.0
    %812 = vmatprep.mubr.f32.mxu0 0.0
    %813 = vmatmul.mubr.f32.gmra.mxu0 %v503
    %v814 = vpop.f32.mrf.mxu0
    %v815 = vadd.f32 %v746, %v814
    %v816 = vpop.f32.mrf.mxu0
    %817 = vdwg.mxu0
    %818 = vst [vmem:[#allocation8 + $0x18] sm:$0xff] %v815
    // Predicated region
    $region46: #{gaussian_noise_nn_forward.1} parent=1 // pred_check
      _
    $region47: #{gaussian_noise_nn_forward.1} parent=1 // pred_check_branch
      %820 = sbr.rel (0) target = $region49
    $region48: #{gaussian_noise_nn_forward.1} parent=1 // pred_region
      %s822 = ssub.s32 512, 512
      %823 = vsyncadd [#allocation4], %s822
      %s825 = sshll.u32 [#allocation8], 4
      %s826 = int_to_ptr.vmem [resolvable:$true] %s825
      %828 = dma.vmem_to_hbm [thread:$0]  %s826, 512, %s8, [#allocation4]
    $region49: #{gaussian_noise_nn_forward.1} parent=1 // pred_fallthru
      _
    // Predicated region
    $region50: #{gaussian_noise_nn_forward.1} parent=1 // pred_check
      _
    $region51: #{gaussian_noise_nn_forward.1} parent=1 // pred_check_branch
      %830 = sbr.rel (0) target = $region53
    $region52: #{gaussian_noise_nn_forward.1} parent=1 // pred_region
      %831 = dma.done [#allocation4], 512
    $region53: #{gaussian_noise_nn_forward.1} parent=1 // pred_fallthru
      _
    %832 = vsyncpa [#allocation3], 1
    %833 = vsyncpa [#allocation6], 1
    %834 = vsyncpa [#allocation4], 1

</llo_original>
